<compile_context>
chip_gen: v7x
topology: tpu7x:2x2x1
jax: 0.10.0
libtpu: 0.0.40
codegen_flags: <defaults>
</compile_context>

<pallas_src>
import math

import jax
import jax.numpy as jnp
from jax.experimental import pallas as pl
from jax.experimental.pallas import tpu as pltpu


def _round_up(n, m):
    return ((n + m - 1) // m) * m


def _sublane_multiple(dtype):
    itemsize = jnp.dtype(dtype).itemsize
    return {4: 8, 2: 16, 1: 32}.get(itemsize, 8)


# --------------------------------------------------------------------------
# Kernels
# --------------------------------------------------------------------------

def _linear_kernel_single_k(x_ref, w_ref, b_ref, o_ref):
    # x_ref: [TM, K]  w_ref: [K, TN]  b_ref: [1, TN]  o_ref: [TM, TN]
    acc = jnp.dot(x_ref[...], w_ref[...], preferred_element_type=jnp.float32)
    o_ref[...] = (acc + b_ref[...].astype(jnp.float32)).astype(o_ref.dtype)


def _linear_kernel_multi_k(x_ref, w_ref, b_ref, o_ref, acc_ref):
    # Reduction axis (K) is the innermost grid axis; acc_ref persists across it.
    k = pl.program_id(2)

    @pl.when(k == 0)
    def _():
        acc_ref[...] = jnp.zeros_like(acc_ref)

    acc_ref[...] += jnp.dot(x_ref[...], w_ref[...],
                            preferred_element_type=jnp.float32)

    @pl.when(k == pl.num_programs(2) - 1)
    def _():
        o_ref[...] = (acc_ref[...] + b_ref[...].astype(jnp.float32)
                      ).astype(o_ref.dtype)


# --------------------------------------------------------------------------
# Wrapper
# --------------------------------------------------------------------------

def expert_forward(x, weight, bias, *,
                   tm_cap=512, tn_cap=512, tk_cap=2048,
                   compute_dtype=None, use_pallas=None):
    """Pallas equivalent of `expert.forward`: y = x @ weight.T + bias.

    x:      [B, C]
    weight: [T, C]   (torch.nn.Linear.weight layout)
    bias:   [T]
    returns [B, T]  (dtype of x)
    """
    B, C = x.shape
    T, C_w = weight.shape
    assert C_w == C, "weight channel dim must match x channel dim"
    out_dtype = x.dtype

    # Tiny shapes: the custom-call launch + padded DMAs dwarf the FLOPs;
    # let XLA's fused dot handle it unless the caller forces the kernel.
    if use_pallas is None:
        use_pallas = (B * C * T) >= 1_000_000
    if not use_pallas:
        return (jnp.dot(x, weight.T) + bias).astype(out_dtype)

    # One-time parameter layout change: [T, C] -> [C, T].  Amortized across
    # calls (it's a reused Linear weight); gives a canonical [M,K]x[K,N] dot
    # in-kernel with no per-tile RHS relayout.
    w_t = weight.T
    b2 = bias.reshape(1, T)

    if compute_dtype is not None:
        # e.g. jnp.bfloat16 on v6e/v7x — MXU-native operands, f32 accumulate.
        x = x.astype(compute_dtype)
        w_t = w_t.astype(compute_dtype)

    in_item = jnp.dtype(x.dtype).itemsize
    out_item = jnp.dtype(out_dtype).itemsize
    sub = _sublane_multiple(x.dtype)

    # Batch tile: packed-sublane multiple of the input dtype, capped.
    TM = min(tm_cap, _round_up(B, sub))

    if C <= tk_cap and T <= tn_cap:
        # ---- weight-stationary, single-K fast path (the common case) ----
        # Full-extent K/N blocks (exempt from the (8,128) rule); weight and
        # bias block indices are grid-invariant -> DMA'd exactly once.
        TK, TN = C, T
        gm, gn, gk = pl.cdiv(B, TM), 1, 1
        grid = (gm,)
        in_specs = [
            pl.BlockSpec((TM, C), lambda i: (i, 0)),    # x
            pl.BlockSpec((C, T), lambda i: (0, 0)),     # weight [C, T], resident
            pl.BlockSpec((1, T), lambda i: (0, 0)),     # bias, resident
        ]
        out_spec = pl.BlockSpec((TM, T), lambda i: (i, 0))
        kernel = _linear_kernel_single_k
        scratch = []
        semantics = ("parallel",)
        x_p, w_p = x, w_t
    else:
        # ---- general tiled path ----
        TN = min(max(tn_cap, 128), _round_up(T, 128))
        if C <= tk_cap:
            TK, K_pad = C, C                     # full-extent K block, no padding
        else:
            TK = min(max(tk_cap, 128), _round_up(C, 128))
            K_pad = _round_up(C, TK)
        if K_pad != C:
            # Zero-pad ONLY the contraction axis (zeros contribute nothing);
            # M / N edge blocks are handled by Pallas masking — no pad/slice.
            x_p = jnp.pad(x, ((0, 0), (0, K_pad - C)))
            w_p = jnp.pad(w_t, ((0, K_pad - C), (0, 0)))
        else:
            x_p, w_p = x, w_t

        gm, gn, gk = pl.cdiv(B, TM), pl.cdiv(T, TN), K_pad // TK
        if gk == 1:
            grid = (gm, gn)
            in_specs = [
                pl.BlockSpec((TM, TK), lambda i, j: (i, 0)),
                pl.BlockSpec((TK, TN), lambda i, j: (0, j)),
                pl.BlockSpec((1, TN), lambda i, j: (0, j)),
            ]
            out_spec = pl.BlockSpec((TM, TN), lambda i, j: (i, j))
            kernel = _linear_kernel_single_k
            scratch = []
            semantics = ("parallel", "parallel")
        else:
            grid = (gm, gn, gk)
            in_specs = [
                pl.BlockSpec((TM, TK), lambda i, j, k: (i, k)),
                pl.BlockSpec((TK, TN), lambda i, j, k: (k, j)),
                pl.BlockSpec((1, TN), lambda i, j, k: (0, j)),
            ]
            out_spec = pl.BlockSpec((TM, TN), lambda i, j, k: (i, j))
            kernel = _linear_kernel_multi_k
            scratch = [pltpu.VMEM((TM, TN), jnp.float32)]
            semantics = ("parallel", "parallel", "arbitrary")

    # Honest byte count: x is re-read once per N tile; the weight is read
    # once per M tile unless its block index is grid-invariant (read once).
    x_reads = gn
    w_reads = 1 if (gn == 1 and gk == 1) else gm
    cost = pl.CostEstimate(
        flops=2 * B * C * T,
        transcendentals=0,
        bytes_accessed=(x_reads * B * C * in_item
                        + w_reads * T * C * in_item
                        + T * in_item
                        + B * T * out_item),
    )

    # Double-buffered footprint + accumulator; set the scoped-VMEM limit
    # explicitly (v5e default scope is only 16 MiB; v7x has 64 MiB/TC total).
    acc_bytes = TM * TN * 4 if scratch else 0
    footprint = (2 * (TM * TK + TK * TN + TN) * in_item
                 + 2 * TM * TN * out_item + acc_bytes)
    vmem_limit = int(min(64 * 2**20, max(2 * footprint, 16 * 2**20)))

    out = pl.pallas_call(
        kernel,
        out_shape=jax.ShapeDtypeStruct((B, T), out_dtype),
        grid=grid,
        in_specs=in_specs,
        out_specs=out_spec,
        scratch_shapes=scratch,
        compiler_params=pltpu.CompilerParams(
            dimension_semantics=semantics,
            vmem_limit_bytes=vmem_limit,
        ),
        cost_estimate=cost,
    )(x_p, w_p, b2)

    return out


def init_expert_params(key, channel, num_tasks, dtype=jnp.float32):
    """Deterministic init matching torch.nn.Linear's default scheme."""
    k_w, k_b = jax.random.split(key)
    bound = 1.0 / math.sqrt(channel)
    weight = jax.random.uniform(
        k_w, (num_tasks, channel), dtype=dtype, minval=-bound, maxval=bound)
    bias = jax.random.uniform(
        k_b, (num_tasks,), dtype=dtype, minval=-bound, maxval=bound)
    return weight, bias


if __name__ == "__main__":
    key = jax.random.PRNGKey(0)

    # 1) Module-scale shapes: batch=8 embeddings, channel=32, num_tasks=8.
    #    (Force the Pallas path so the kernel itself is exercised.)
    k_x, k_p, k2 = jax.random.split(key, 3)
    batch, channel, num_tasks = 8, 32, 8
    x = jax.random.normal(k_x, (batch, channel), dtype=jnp.float32)
    weight, bias = init_expert_params(k_p, channel, num_tasks)

    out = expert_forward(x, weight, bias, use_pallas=True)
    out = jax.block_until_ready(out)
    ref = x @ weight.T + bias
    assert out.shape == (batch, num_tasks)
    assert jnp.allclose(out, ref, atol=1e-5, rtol=1e-5)

    # 2) Larger batch: exercises the weight-stationary path with a partial
    #    (masked) edge block along M — no wrapper padding or slicing.
    k_x2, k_p2, k3 = jax.random.split(k2, 3)
    x2 = jax.random.normal(k_x2, (1030, 256), dtype=jnp.float32)
    w2, b2 = init_expert_params(k_p2, 256, 40)
    out2 = jax.block_until_ready(expert_forward(x2, w2, b2, use_pallas=True))
    ref2 = x2 @ w2.T + b2
    assert jnp.allclose(out2, ref2, atol=1e-4, rtol=1e-4)

    # 3) Force the multi-K accumulator path (small tk_cap) with K zero-padding
    #    and masked N edge blocks.
    k_x3, k_p3 = jax.random.split(k3)
    x3 = jax.random.normal(k_x3, (64, 320), dtype=jnp.float32)
    w3, b3 = init_expert_params(k_p3, 320, 8)
    out3 = jax.block_until_ready(
        expert_forward(x3, w3, b3, use_pallas=True, tk_cap=128))
    ref3 = x3 @ w3.T + b3
    assert jnp.allclose(out3, ref3, atol=1e-4, rtol=1e-4)

    print("KERNEL_OK")
</pallas_src>

<mosaic_0001>
module attributes {stable_mosaic.version = 11 : i64} {
  func.func @_linear_kernel_single_k(%arg0: i32, %arg1: memref<8x32xf32, #tpu.memory_space<vmem>>, %arg2: memref<32x8xf32, #tpu.memory_space<vmem>>, %arg3: memref<1x8xf32, #tpu.memory_space<vmem>>, %arg4: memref<8x8xf32, #tpu.memory_space<vmem>>) attributes {dimension_semantics = [#tpu.dimension_semantics<parallel>], iteration_bounds = array<i64: 1>, scalar_prefetch = 0 : i64, scratch_operands = 0 : i64, tpu.core_type = #tpu.core_type<tc>, window_params = [{transform_indices = @transform_0, window_bounds = array<i64: 8, 32>}, {pipeline_mode = #tpu.pipeline_mode<synchronous>, transform_indices = @transform_1, window_bounds = array<i64: 32, 8>}, {pipeline_mode = #tpu.pipeline_mode<synchronous>, transform_indices = @transform_2, window_bounds = array<i64: 1, 8>}, {transform_indices = @transform_3, window_bounds = array<i64: 8, 8>}]} {
    %c0 = arith.constant 0 : index
    %c0_0 = arith.constant 0 : index
    %0 = vector.load %arg1[%c0, %c0_0] : memref<8x32xf32, #tpu.memory_space<vmem>>, vector<8x32xf32>
    %c0_1 = arith.constant 0 : index
    %c0_2 = arith.constant 0 : index
    %1 = vector.load %arg2[%c0_1, %c0_2] : memref<32x8xf32, #tpu.memory_space<vmem>>, vector<32x8xf32>
    %cst = arith.constant dense<0.000000e+00> : vector<8x8xf32>
    %2 = tpu.matmul %0, %1, %cst {dimension_numbers = #tpu.dot_dimension_numbers<[1], [0], [0], [1], [0, 0, 1, 1], [], []>} : vector<8x32xf32>, vector<32x8xf32>, vector<8x8xf32> -> vector<8x8xf32>
    %c0_3 = arith.constant 0 : index
    %c0_4 = arith.constant 0 : index
    %3 = vector.load %arg3[%c0_3, %c0_4] : memref<1x8xf32, #tpu.memory_space<vmem>>, vector<1x8xf32>
    %4 = vector.broadcast %3 : vector<1x8xf32> to vector<8x8xf32>
    %5 = arith.addf %2, %4 : vector<8x8xf32>
    %c0_5 = arith.constant 0 : index
    %c0_6 = arith.constant 0 : index
    %6 = vector.load %arg4[%c0_5, %c0_6] : memref<8x8xf32, #tpu.memory_space<vmem>>, vector<8x8xf32>
    tpu.vector_store %arg4[%c0_5, %c0_6], %5 {strides = array<i32>} : memref<8x8xf32, #tpu.memory_space<vmem>>, vector<8x8xf32>,
    return
  }
  func.func @transform_0(%arg0: i32) -> (i32, i32) {
    %c0_i32 = arith.constant 0 : i32
    %c0_i32_0 = arith.constant 0 : i32
    return %arg0, %c0_i32 : i32, i32
  }
  func.func @transform_1(%arg0: i32) -> (i32, i32) {
    %c0_i32 = arith.constant 0 : i32
    %c0_i32_0 = arith.constant 0 : i32
    %c0_i32_1 = arith.constant 0 : i32
    return %c0_i32, %c0_i32_0 : i32, i32
  }
  func.func @transform_2(%arg0: i32) -> (i32, i32) {
    %c0_i32 = arith.constant 0 : i32
    %c0_i32_0 = arith.constant 0 : i32
    %c0_i32_1 = arith.constant 0 : i32
    return %c0_i32, %c0_i32_0 : i32, i32
  }
  func.func @transform_3(%arg0: i32) -> (i32, i32) {
    %c0_i32 = arith.constant 0 : i32
    %c0_i32_0 = arith.constant 0 : i32
    return %arg0, %c0_i32 : i32, i32
  }
}

</mosaic_0001>

<llo_original>
// kernel: tpu_custom_call.1
$region0: #{tpu_custom_call.1}
  #allocation0 [shape = 'u32[]', space=smem, size = 0x4, offset = 0x4, fixed_abs, tag = 'smem constant byte address 0x4 - core index']
  #allocation1 [shape = 'u32[144,128]{1,0:T(1,128)}', space=vmem, size = 0x12000, scoped, tag = 'internal scratch']
  %s0 = inlined_call_operand.vmem [shape: f32[8,32], index: 0, kind: input, shape index: {}]
  %s1 = inlined_call_operand.vmem [shape: f32[32,8], index: 1, kind: input, shape index: {}]
  %s2 = inlined_call_operand.vmem [shape: f32[1,8], index: 2, kind: input, shape index: {}]
  %s3 = inlined_call_operand.hbm [shape: f32[8,8], index: 3, kind: output, shape index: {}]
  %s4 = sld [smem:[#allocation0]]
  $region22: #{tpu_custom_call.1} parent=0
    _
  %s6 = ssub.s32 1, %s4
  %s7 = scalar_select 0, %s6, %s4
  $region1: #{tpu_custom_call.1} parent=0
    #allocation2 [shape = 'u8[4096]{0}', space=vmem, size = 0x1000, scoped, tag = 'output window, operand 0, single buffered']
    #allocation3 [shape = 's32[1]{0}', space=sflag, size = 0x4, scoped, tag = 'scoped memory for tpu_custom_call.1']
    %8 = vsyncpa [#allocation3], 0
    // Predicated region
    $region2: #{tpu_custom_call.1} parent=1 // pred_check
      _
    $region3: #{tpu_custom_call.1} parent=1 // pred_check_branch
      %10 = sbr.rel (0) target = $region5
    $region4: #{tpu_custom_call.1} parent=1 // pred_region
      _
    $region5: #{tpu_custom_call.1} parent=1 // pred_fallthru
      _
    // Predicated region
    $region6: #{tpu_custom_call.1} parent=1 // pred_check
      _
    $region7: #{tpu_custom_call.1} parent=1 // pred_check_branch
      %12 = sbr.rel (0) target = $region9
    $region8: #{tpu_custom_call.1} parent=1 // pred_region
      _
    $region9: #{tpu_custom_call.1} parent=1 // pred_fallthru
      _
    // Predicated region
    $region10: #{tpu_custom_call.1} parent=1 // pred_check
      _
    $region11: #{tpu_custom_call.1} parent=1 // pred_check_branch
      %14 = sbr.rel (0) target = $region13
    $region12: #{tpu_custom_call.1} parent=1 // pred_region
      _
    $region13: #{tpu_custom_call.1} parent=1 // pred_fallthru
      _
    %v15 = vld [vmem:[%s0] sm:$0xff]
    %v16 = vld [vmem:[%s1] sm:$0xff]
    %v17 = vld [vmem:[%s1 + $0x8] sm:$0xff]
    %v18 = vld [vmem:[%s1 + $0x10] sm:$0xff]
    %v19 = vld [vmem:[%s1 + $0x18] sm:$0xff]
    %v20 = vld [vmem:[%s2] sm:$0x1]
    %v22 = vlaneseq
    %v23 = vshrl.u32 %v22, 7
    %v24 = vsub.s32 0, %v23
    %v25 = vrot.slane %v20, %v24
    %vm27 = vcmask 261120
    %v29 = vsel %vm27, %v15, 0
    %31 = vmatprep.subr.mxu0 0.0
    %32 = vmatpush1.msra.mxu0 %v16
    %33 = vmatprep.subr.mxu0 0.0
    %34 = vmatpush1.msra.mxu0 %v17
    %35 = vmatprep.subr.mxu0 0.0
    %36 = vmatpush1.msra.mxu0 %v18
    %37 = vmatprep.subr.mxu0 0.0
    %38 = vmatpush1.msra.mxu0 %v19
    %39 = vmatprep.subr.mxu0 0.0
    %40 = vmatpush1.msra.mxu0 0.0
    %41 = vmatprep.subr.mxu0 0.0
    %42 = vmatpush1.msra.mxu0 0.0
    %43 = vmatprep.subr.mxu0 0.0
    %44 = vmatpush1.msra.mxu0 0.0
    %45 = vmatprep.subr.mxu0 0.0
    %46 = vmatpush1.msra.mxu0 0.0
    %47 = vmatprep.subr.mxu0 0.0
    %48 = vmatpush1.msra.mxu0 0.0
    %49 = vmatprep.subr.mxu0 0.0
    %50 = vmatpush1.msra.mxu0 0.0
    %51 = vmatprep.subr.mxu0 0.0
    %52 = vmatpush1.msra.mxu0 0.0
    %53 = vmatprep.subr.mxu0 0.0
    %54 = vmatpush1.msra.mxu0 0.0
    %55 = vmatprep.subr.mxu0 0.0
    %56 = vmatpush1.msra.mxu0 0.0
    %57 = vmatprep.subr.mxu0 0.0
    %58 = vmatpush1.msra.mxu0 0.0
    %59 = vmatprep.subr.mxu0 0.0
    %60 = vmatpush1.msra.mxu0 0.0
    %61 = vmatprep.subr.mxu0 0.0
    %62 = vmatpush1.msra.mxu0 0.0
    %63 = vmatprep.subr.mxu0 0.0
    %64 = vmatpush1.msra.mxu0 0.0
    %65 = vmatprep.subr.mxu0 0.0
    %66 = vmatpush1.msra.mxu0 0.0
    %67 = vmatprep.subr.mxu0 0.0
    %68 = vmatpush1.msra.mxu0 0.0
    %69 = vmatprep.subr.mxu0 0.0
    %70 = vmatpush1.msra.mxu0 0.0
    %71 = vmatprep.subr.mxu0 0.0
    %72 = vmatpush1.msra.mxu0 0.0
    %73 = vmatprep.subr.mxu0 0.0
    %74 = vmatpush1.msra.mxu0 0.0
    %75 = vmatprep.subr.mxu0 0.0
    %76 = vmatpush1.msra.mxu0 0.0
    %77 = vmatprep.subr.mxu0 0.0
    %78 = vmatpush1.msra.mxu0 0.0
    %79 = vmatprep.subr.mxu0 0.0
    %80 = vmatpush1.msra.mxu0 0.0
    %81 = vmatprep.subr.mxu0 0.0
    %82 = vmatpush1.msra.mxu0 0.0
    %83 = vmatprep.subr.mxu0 0.0
    %84 = vmatpush1.msra.mxu0 0.0
    %85 = vmatprep.subr.mxu0 0.0
    %86 = vmatpush1.msra.mxu0 0.0
    %87 = vmatprep.subr.mxu0 0.0
    %88 = vmatpush1.msra.mxu0 0.0
    %89 = vmatprep.subr.mxu0 0.0
    %90 = vmatpush1.msra.mxu0 0.0
    %91 = vmatprep.subr.mxu0 0.0
    %92 = vmatpush1.msra.mxu0 0.0
    %93 = vmatprep.subr.mxu0 0.0
    %94 = vmatpush1.msra.mxu0 0.0
    %95 = vmatprep.mubr.f32.mxu0 0.0
    %96 = vmatmul.mubr.f32.gmra.mrb[0].mxu0 %v29
    %v97 = vpop.f32.mrb[0].mxu0
    %v98 = vadd.f32 %v25, %v97
    %v99 = vpop.f32.mrb[0].mxu0
    %100 = vdwg.mxu0
    %vm101 = vcmask 64512
    %102 = vst.msk [vmem:[#allocation2] sm:$0xff] %vm101, %v98
    // Predicated region
    $region14: #{tpu_custom_call.1} parent=1 // pred_check
      _
    $region15: #{tpu_custom_call.1} parent=1 // pred_check_branch
      %104 = sbr.rel (0) target = $region17
    $region16: #{tpu_custom_call.1} parent=1 // pred_region
      %s106 = ssub.s32 128, 128
      %107 = vsyncadd [#allocation3], %s106
      %s109 = sshll.u32 [#allocation2], 4
      %s110 = int_to_ptr.vmem [resolvable:$true] %s109
      %112 = dma.vmem_to_hbm [thread:$0]  %s110, 128, %s3, [#allocation3]
    $region17: #{tpu_custom_call.1} parent=1 // pred_fallthru
      _
    // Predicated region
    $region18: #{tpu_custom_call.1} parent=1 // pred_check
      _
    $region19: #{tpu_custom_call.1} parent=1 // pred_check_branch
      %114 = sbr.rel (0) target = $region21
    $region20: #{tpu_custom_call.1} parent=1 // pred_region
      %115 = dma.done [#allocation3], 128
    $region21: #{tpu_custom_call.1} parent=1 // pred_fallthru
      _
    %116 = vsyncpa [#allocation3], 1

</llo_original>
